<compile_context>
chip_gen: v5e
topology: v5e:2x2
jax: 0.10.0
libtpu: 0.0.40
codegen_flags: <defaults>
</compile_context>

<pallas_src>
import functools

import jax
import jax.numpy as jnp
from jax import lax
from jax.experimental import pallas as pl
from jax.experimental.pallas import tpu as pltpu


def _round_up(x, m):
    return (x + m - 1) // m * m


# -----------------------------------------------------------------------------
# Kernel: the LSTMCell recurrence, T steps inside a single pallas_call.
# All operands arrive as whole-array VMEM blocks (no grid).
# -----------------------------------------------------------------------------
def _lstm_cell_seq_kernel(xs_ref, h0_ref, c0_ref,
                          w1ih_ref, b1ih_ref, w2ih_ref,
                          w1hh_ref, b1hh_ref, w2hh_ref, bg_ref,
                          hs_ref, cfin_ref, ih_ref):
    tb, _ = xs_ref.shape            # (T*Bp, D)
    bp, hp = h0_ref.shape           # (Bp, Hp)  Hp = 128-lane padded hidden
    t_steps = tb // bp
    mm_dt = w1ih_ref.dtype          # matmul operand dtype (f32 or bf16)

    # ---- input path hoisted out of the recurrence (depends only on x_t) ------
    # Two batched matmuls with M = T*Bp rows instead of T matmuls with M = Bp.
    # The folded gate bias (b2_ih + b2_hh) is added here, off the serial path,
    # and the result parked in a VMEM scratch ref.
    ih1 = jnp.maximum(
        jnp.dot(xs_ref[...], w1ih_ref[...], preferred_element_type=jnp.float32)
        + b1ih_ref[...], 0.0)
    ih_ref[...] = jnp.dot(ih1.astype(mm_dt), w2ih_ref[...],
                          preferred_element_type=jnp.float32) + bg_ref[...]

    # Invariant weights / biases: load once, outside the sequential loop.
    w1hh = w1hh_ref[...]
    b1hh = b1hh_ref[...]
    w2hh = w2hh_ref[...]

    def step(t, carry):
        h, c = carry                # f32 (Bp, Hp)

        # recurrent path: inner_cell(hidden) = Linear -> ReLU -> Linear(4H)
        hh1 = jnp.maximum(
            jnp.dot(h.astype(mm_dt), w1hh, preferred_element_type=jnp.float32)
            + b1hh, 0.0)
        hh = jnp.dot(hh1.astype(mm_dt), w2hh,
                     preferred_element_type=jnp.float32)

        row = pl.multiple_of(t * bp, 8)
        gates = ih_ref[pl.ds(row, bp), :] + hh

        # Each gate chunk is a whole 128-lane slab (H padded to Hp), so these
        # slices are vreg-aligned: no sub-128-lane relayout on the hot path.
        i_g = jax.nn.sigmoid(gates[:, 0 * hp:1 * hp])
        f_g = jax.nn.sigmoid(gates[:, 1 * hp:2 * hp])
        c_g = jnp.tanh(gates[:, 2 * hp:3 * hp])
        o_g = jax.nn.sigmoid(gates[:, 3 * hp:4 * hp])

        nc = f_g * c + i_g * c_g
        nh = o_g * jnp.tanh(nc)

        hs_ref[pl.ds(row, bp), :] = nh          # lane-dense (Bp, 128k) store
        return (nh, nc)

    # Fully unroll short sequences (LLO sees whole schedule); cap the unroll
    # factor for long ones so code size stays bounded.
    unroll = True if t_steps <= 32 else 8
    _, c = lax.fori_loop(0, t_steps, step, (h0_ref[...], c0_ref[...]),
                         unroll=unroll)
    cfin_ref[...] = c


# -----------------------------------------------------------------------------
# Parameter padding helpers (zero padding is exactly state-preserving: padded
# hidden lanes of h and c stay identically 0 across steps).
# -----------------------------------------------------------------------------
def _pad_gate_weight(w2, h, hp):
    """(H_in, 4H) gate Linear -> (Hp, 4*Hp): each gate on its own 128-lane
    aligned block; padded rows / lanes are zero."""
    h_in = w2.shape[0]
    w2 = w2.reshape(h_in, 4, h)
    w2 = jnp.pad(w2, ((0, hp - h_in), (0, 0), (0, hp - h)))
    return w2.reshape(hp, 4 * hp)


def _pad_gate_bias(b, h, hp):
    return jnp.pad(b.reshape(4, h), ((0, 0), (0, hp - h))).reshape(1, 4 * hp)


@functools.partial(jax.jit, static_argnames=("matmul_dtype",))
def lstm_cell_sequence(xs, hidden, params, matmul_dtype=jnp.float32):
    """Applies the LSTMCell recurrence to a (T, B, D) input sequence inside ONE
    Pallas kernel invocation.  Returns (h_all (T,B,H), c_final (B,H))."""
    h0, c0 = hidden
    assert h0.shape[0] == 1 and c0.shape[0] == 1, "only nlayers == 1 implemented"
    # TODO(synk): nlayers > 1 (plain Linear(H,4H) gate blocks per extra layer)
    # and dropout with p > 0 between layers are not implemented.

    t_steps, b, d = xs.shape
    h = h0.shape[-1]
    hp = max(128, _round_up(h, 128))     # lane-pad hidden dim
    bp = max(8, _round_up(b, 8))         # sublane-pad batch
    f32 = jnp.float32

    xs_p = jnp.pad(xs, ((0, 0), (0, bp - b), (0, 0)))
    xs_p = xs_p.reshape(t_steps * bp, d).astype(matmul_dtype)
    h0_p = jnp.pad(h0[0].astype(f32), ((0, bp - b), (0, hp - h)))
    c0_p = jnp.pad(c0[0].astype(f32), ((0, bp - b), (0, hp - h)))

    w1ih = jnp.pad(params["w1ih"], ((0, 0), (0, hp - h))).astype(matmul_dtype)
    b1ih = jnp.pad(params["b1ih"].reshape(1, -1), ((0, 0), (0, hp - h))).astype(f32)
    w2ih = _pad_gate_weight(params["w2ih"], h, hp).astype(matmul_dtype)
    w1hh = jnp.pad(params["w1hh"], ((0, hp - h), (0, hp - h))).astype(matmul_dtype)
    b1hh = jnp.pad(params["b1hh"].reshape(1, -1), ((0, 0), (0, hp - h))).astype(f32)
    w2hh = _pad_gate_weight(params["w2hh"], h, hp).astype(matmul_dtype)
    bias_g = _pad_gate_bias(params["b2ih"] + params["b2hh"], h, hp).astype(f32)

    vmem = pl.BlockSpec(memory_space=pltpu.MemorySpace.VMEM)
    hs_p, c_p = pl.pallas_call(
        _lstm_cell_seq_kernel,
        out_shape=(jax.ShapeDtypeStruct((t_steps * bp, hp), f32),
                   jax.ShapeDtypeStruct((bp, hp), f32)),
        in_specs=[vmem] * 10,
        out_specs=(vmem, vmem),
        scratch_shapes=[pltpu.VMEM((t_steps * bp, 4 * hp), f32)],
        compiler_params=pltpu.CompilerParams(vmem_limit_bytes=32 * 1024 * 1024),
    )(xs_p, h0_p, c0_p, w1ih, b1ih, w2ih, w1hh, b1hh, w2hh, bias_g)

    hs = hs_p.reshape(t_steps, bp, hp)[:, :b, :h]
    return hs, c_p[:b, :h]


def lstm_cell_forward(x, hidden, params, matmul_dtype=jnp.float32):
    """Exact analogue of LSTMCell.forward(input, hidden) for nlayers=1.
    x: (B, input_size); hidden: (h, c), each (1, B, hidden_size).
    Returns (hy, cy), each (1, B, hidden_size)."""
    hs, c_fin = lstm_cell_sequence(x[None], hidden, params,
                                   matmul_dtype=matmul_dtype)
    return hs[-1][None], c_fin[None]


# -----------------------------------------------------------------------------
# Pure-JAX references mirroring the PyTorch module.
# -----------------------------------------------------------------------------
_HI = jax.lax.Precision.HIGHEST


def lstm_cell_ref(x, hidden, p):
    hx, cx = hidden[0][0], hidden[1][0]
    hsz = hx.shape[-1]
    ih = jnp.dot(jnp.maximum(jnp.dot(x, p["w1ih"], precision=_HI) + p["b1ih"], 0.0),
                 p["w2ih"], precision=_HI) + p["b2ih"]
    hh = jnp.dot(jnp.maximum(jnp.dot(hx, p["w1hh"], precision=_HI) + p["b1hh"], 0.0),
                 p["w2hh"], precision=_HI) + p["b2hh"]
    g = ih + hh
    i_g = jax.nn.sigmoid(g[:, :hsz])
    f_g = jax.nn.sigmoid(g[:, hsz:2 * hsz])
    c_g = jnp.tanh(g[:, 2 * hsz:3 * hsz])
    o_g = jax.nn.sigmoid(g[:, 3 * hsz:])
    ncx = f_g * cx + i_g * c_g
    nhx = o_g * jnp.tanh(ncx)
    return nhx[None], ncx[None]


def lstm_seq_ref(xs, hidden, p):
    hy, cy = hidden
    hs = []
    for t in range(xs.shape[0]):
        hy, cy = lstm_cell_ref(xs[t], (hy, cy), p)
        hs.append(hy[0])
    return jnp.stack(hs, 0), cy[0]


def init_params(key, input_size, hidden_size):
    """PyTorch-style uniform(-1/sqrt(fan_in), 1/sqrt(fan_in)) init; weights are
    stored pre-transposed as (in_features, out_features), biases are 1-D."""
    def linear(k, fan_in, fan_out):
        kw, kb = jax.random.split(k)
        bound = 1.0 / float(fan_in) ** 0.5
        w = jax.random.uniform(kw, (fan_in, fan_out), jnp.float32, -bound, bound)
        b = jax.random.uniform(kb, (fan_out,), jnp.float32, -bound, bound)
        return w, b

    ks = jax.random.split(key, 4)
    w1ih, b1ih = linear(ks[0], input_size, hidden_size)        # inner_cell ih: Linear(D, H)
    w2ih, b2ih = linear(ks[1], hidden_size, 4 * hidden_size)   #                Linear(H, 4H)
    w1hh, b1hh = linear(ks[2], hidden_size, hidden_size)       # inner_cell hh: Linear(H, H)
    w2hh, b2hh = linear(ks[3], hidden_size, 4 * hidden_size)   #                Linear(H, 4H)
    return dict(w1ih=w1ih, b1ih=b1ih, w2ih=w2ih, b2ih=b2ih,
                w1hh=w1hh, b1hh=b1hh, w2hh=w2hh, b2hh=b2hh)


if __name__ == "__main__":
    SEQ, BATCH, INPUT, HIDDEN = 8, 4, 16, 32

    key = jax.random.PRNGKey(0)
    k_x, k_h, k_c, k_p = jax.random.split(key, 4)
    xs = jax.random.normal(k_x, (SEQ, BATCH, INPUT), jnp.float32)
    h0 = 0.1 * jax.random.normal(k_h, (1, BATCH, HIDDEN), jnp.float32)
    c0 = 0.1 * jax.random.normal(k_c, (1, BATCH, HIDDEN), jnp.float32)
    params = init_params(k_p, INPUT, HIDDEN)
    hidden = (h0, c0)

    # 1) Exact LSTMCell.forward semantics: one step, (input, hidden) -> (hy, cy).
    hy, cy = jax.block_until_ready(lstm_cell_forward(xs[0], hidden, params))
    hy_r, cy_r = lstm_cell_ref(xs[0], hidden, params)
    assert hy.shape == (1, BATCH, HIDDEN) and cy.shape == (1, BATCH, HIDDEN)
    assert jnp.allclose(hy, hy_r, atol=1e-4, rtol=1e-4), float(jnp.max(jnp.abs(hy - hy_r)))
    assert jnp.allclose(cy, cy_r, atol=1e-4, rtol=1e-4), float(jnp.max(jnp.abs(cy - cy_r)))

    # 2) The same cell applied over SEQ steps inside ONE kernel invocation (f32).
    hs, c_fin = jax.block_until_ready(lstm_cell_sequence(xs, hidden, params))
    hs_r, c_r = lstm_seq_ref(xs, hidden, params)
    assert hs.shape == (SEQ, BATCH, HIDDEN)
    assert jnp.allclose(hs, hs_r, atol=5e-4, rtol=5e-4), float(jnp.max(jnp.abs(hs - hs_r)))
    assert jnp.allclose(c_fin, c_r, atol=5e-4, rtol=5e-4), float(jnp.max(jnp.abs(c_fin - c_r)))

    # 3) bf16 MXU operands, f32 accumulation and f32 gate math (loose tolerance).
    hs_bf, _ = jax.block_until_ready(
        lstm_cell_sequence(xs, hidden, params, matmul_dtype=jnp.bfloat16))
    assert jnp.allclose(hs_bf, hs_r, atol=5e-2, rtol=5e-2), float(jnp.max(jnp.abs(hs_bf - hs_r)))

    print("KERNEL_OK")
</pallas_src>

<mosaic_0001>
module attributes {stable_mosaic.version = 11 : i64} {
  func.func @_lstm_cell_seq_kernel(%arg0: memref<8x16xf32, #tpu.memory_space<vmem>>, %arg1: memref<8x128xf32, #tpu.memory_space<vmem>>, %arg2: memref<8x128xf32, #tpu.memory_space<vmem>>, %arg3: memref<16x128xf32, #tpu.memory_space<vmem>>, %arg4: memref<1x128xf32, #tpu.memory_space<vmem>>, %arg5: memref<128x512xf32, #tpu.memory_space<vmem>>, %arg6: memref<128x128xf32, #tpu.memory_space<vmem>>, %arg7: memref<1x128xf32, #tpu.memory_space<vmem>>, %arg8: memref<128x512xf32, #tpu.memory_space<vmem>>, %arg9: memref<1x512xf32, #tpu.memory_space<vmem>>, %arg10: memref<8x128xf32, #tpu.memory_space<vmem>>, %arg11: memref<8x128xf32, #tpu.memory_space<vmem>>, %arg12: memref<8x512xf32, #tpu.memory_space<vmem>>) attributes {dimension_semantics = [], scalar_prefetch = 0 : i64, scratch_operands = 1 : i64, tpu.core_type = #tpu.core_type<tc>} {
    %c0 = arith.constant 0 : index
    %c0_0 = arith.constant 0 : index
    %0 = vector.load %arg0[%c0, %c0_0] : memref<8x16xf32, #tpu.memory_space<vmem>>, vector<8x16xf32>
    %c0_1 = arith.constant 0 : index
    %c0_2 = arith.constant 0 : index
    %1 = vector.load %arg3[%c0_1, %c0_2] : memref<16x128xf32, #tpu.memory_space<vmem>>, vector<16x128xf32>
    %cst = arith.constant dense<0.000000e+00> : vector<8x128xf32>
    %2 = tpu.matmul %0, %1, %cst {dimension_numbers = #tpu.dot_dimension_numbers<[1], [0], [0], [1], [0, 0, 1, 1], [], []>} : vector<8x16xf32>, vector<16x128xf32>, vector<8x128xf32> -> vector<8x128xf32>
    %c0_3 = arith.constant 0 : index
    %c0_4 = arith.constant 0 : index
    %3 = vector.load %arg4[%c0_3, %c0_4] : memref<1x128xf32, #tpu.memory_space<vmem>>, vector<1x128xf32>
    %4 = vector.broadcast %3 : vector<1x128xf32> to vector<8x128xf32>
    %5 = arith.addf %2, %4 : vector<8x128xf32>
    %cst_5 = arith.constant 0.000000e+00 : f32
    %6 = vector.broadcast %cst_5 : f32 to vector<8x128xf32>
    %7 = arith.maximumf %5, %6 : vector<8x128xf32>
    %c0_6 = arith.constant 0 : index
    %c0_7 = arith.constant 0 : index
    %8 = vector.load %arg5[%c0_6, %c0_7] : memref<128x512xf32, #tpu.memory_space<vmem>>, vector<128x512xf32>
    %cst_8 = arith.constant dense<0.000000e+00> : vector<8x512xf32>
    %9 = tpu.matmul %7, %8, %cst_8 {dimension_numbers = #tpu.dot_dimension_numbers<[1], [0], [0], [1], [0, 0, 1, 1], [], []>} : vector<8x128xf32>, vector<128x512xf32>, vector<8x512xf32> -> vector<8x512xf32>
    %c0_9 = arith.constant 0 : index
    %c0_10 = arith.constant 0 : index
    %10 = vector.load %arg9[%c0_9, %c0_10] : memref<1x512xf32, #tpu.memory_space<vmem>>, vector<1x512xf32>
    %11 = vector.broadcast %10 : vector<1x512xf32> to vector<8x512xf32>
    %12 = arith.addf %9, %11 : vector<8x512xf32>
    %c0_11 = arith.constant 0 : index
    %c0_12 = arith.constant 0 : index
    %13 = vector.load %arg12[%c0_11, %c0_12] : memref<8x512xf32, #tpu.memory_space<vmem>>, vector<8x512xf32>
    tpu.vector_store %arg12[%c0_11, %c0_12], %12 {strides = array<i32>} : memref<8x512xf32, #tpu.memory_space<vmem>>, vector<8x512xf32>,
    %c0_13 = arith.constant 0 : index
    %c0_14 = arith.constant 0 : index
    %14 = vector.load %arg6[%c0_13, %c0_14] : memref<128x128xf32, #tpu.memory_space<vmem>>, vector<128x128xf32>
    %c0_15 = arith.constant 0 : index
    %c0_16 = arith.constant 0 : index
    %15 = vector.load %arg7[%c0_15, %c0_16] : memref<1x128xf32, #tpu.memory_space<vmem>>, vector<1x128xf32>
    %c0_17 = arith.constant 0 : index
    %c0_18 = arith.constant 0 : index
    %16 = vector.load %arg8[%c0_17, %c0_18] : memref<128x512xf32, #tpu.memory_space<vmem>>, vector<128x512xf32>
    %c0_19 = arith.constant 0 : index
    %c0_20 = arith.constant 0 : index
    %17 = vector.load %arg1[%c0_19, %c0_20] : memref<8x128xf32, #tpu.memory_space<vmem>>, vector<8x128xf32>
    %c0_21 = arith.constant 0 : index
    %c0_22 = arith.constant 0 : index
    %18 = vector.load %arg2[%c0_21, %c0_22] : memref<8x128xf32, #tpu.memory_space<vmem>>, vector<8x128xf32>
    %c0_i32 = arith.constant 0 : i32
    %cst_23 = arith.constant dense<0.000000e+00> : vector<8x128xf32>
    %19 = tpu.matmul %17, %14, %cst_23 {dimension_numbers = #tpu.dot_dimension_numbers<[1], [0], [0], [1], [0, 0, 1, 1], [], []>} : vector<8x128xf32>, vector<128x128xf32>, vector<8x128xf32> -> vector<8x128xf32>
    %20 = vector.broadcast %15 : vector<1x128xf32> to vector<8x128xf32>
    %21 = arith.addf %19, %20 : vector<8x128xf32>
    %cst_24 = arith.constant 0.000000e+00 : f32
    %22 = vector.broadcast %cst_24 : f32 to vector<8x128xf32>
    %23 = arith.maximumf %21, %22 : vector<8x128xf32>
    %cst_25 = arith.constant dense<0.000000e+00> : vector<8x512xf32>
    %24 = tpu.matmul %23, %16, %cst_25 {dimension_numbers = #tpu.dot_dimension_numbers<[1], [0], [0], [1], [0, 0, 1, 1], [], []>} : vector<8x128xf32>, vector<128x512xf32>, vector<8x512xf32> -> vector<8x512xf32>
    %c8_i32 = arith.constant 8 : i32
    %25 = arith.muli %c0_i32, %c8_i32 : i32
    %26 = tpu.assume_multiple %25, 8 : i32
    %27 = arith.index_cast %26 : i32 to index
    %c0_26 = arith.constant 0 : index
    %28 = vector.load %arg12[%27, %c0_26] : memref<8x512xf32, #tpu.memory_space<vmem>>, vector<8x512xf32>
    %29 = arith.addf %28, %24 : vector<8x512xf32>
    %30 = vector.extract_strided_slice %29 {offsets = [0, 0], sizes = [8, 128], strides = [1, 1]} : vector<8x512xf32> to vector<8x128xf32>
    %31 = arith.negf %30 : vector<8x128xf32>
    %32 = math.exp %31 : vector<8x128xf32>
    %cst_27 = arith.constant 1.000000e+00 : f32
    %33 = vector.broadcast %cst_27 : f32 to vector<8x128xf32>
    %34 = arith.addf %33, %32 : vector<8x128xf32>
    %35 = arith.divf %33, %34 : vector<8x128xf32>
    %36 = vector.extract_strided_slice %29 {offsets = [0, 128], sizes = [8, 128], strides = [1, 1]} : vector<8x512xf32> to vector<8x128xf32>
    %37 = arith.negf %36 : vector<8x128xf32>
    %38 = math.exp %37 : vector<8x128xf32>
    %cst_28 = arith.constant 1.000000e+00 : f32
    %39 = vector.broadcast %cst_28 : f32 to vector<8x128xf32>
    %40 = arith.addf %39, %38 : vector<8x128xf32>
    %41 = arith.divf %39, %40 : vector<8x128xf32>
    %42 = vector.extract_strided_slice %29 {offsets = [0, 256], sizes = [8, 128], strides = [1, 1]} : vector<8x512xf32> to vector<8x128xf32>
    %43 = math.tanh %42 : vector<8x128xf32>
    %44 = vector.extract_strided_slice %29 {offsets = [0, 384], sizes = [8, 128], strides = [1, 1]} : vector<8x512xf32> to vector<8x128xf32>
    %45 = arith.negf %44 : vector<8x128xf32>
    %46 = math.exp %45 : vector<8x128xf32>
    %cst_29 = arith.constant 1.000000e+00 : f32
    %47 = vector.broadcast %cst_29 : f32 to vector<8x128xf32>
    %48 = arith.addf %47, %46 : vector<8x128xf32>
    %49 = arith.divf %47, %48 : vector<8x128xf32>
    %50 = arith.mulf %41, %18 : vector<8x128xf32>
    %51 = arith.mulf %35, %43 : vector<8x128xf32>
    %52 = arith.addf %50, %51 : vector<8x128xf32>
    %53 = math.tanh %52 : vector<8x128xf32>
    %54 = arith.mulf %49, %53 : vector<8x128xf32>
    %55 = arith.index_cast %26 : i32 to index
    %c0_30 = arith.constant 0 : index
    %56 = vector.load %arg10[%55, %c0_30] : memref<8x128xf32, #tpu.memory_space<vmem>>, vector<8x128xf32>
    tpu.vector_store %arg10[%55, %c0_30], %54 {strides = array<i32>} : memref<8x128xf32, #tpu.memory_space<vmem>>, vector<8x128xf32>,
    %c1_i32 = arith.constant 1 : i32
    %c0_31 = arith.constant 0 : index
    %c0_32 = arith.constant 0 : index
    %57 = vector.load %arg11[%c0_31, %c0_32] : memref<8x128xf32, #tpu.memory_space<vmem>>, vector<8x128xf32>
    tpu.vector_store %arg11[%c0_31, %c0_32], %52 {strides = array<i32>} : memref<8x128xf32, #tpu.memory_space<vmem>>, vector<8x128xf32>,
    return
  }
}

</mosaic_0001>

<llo_original>
// kernel: lstm_cell_sequence.1
$region0: #{lstm_cell_sequence.1}
  #allocation0 [shape = 'u32[]', space=smem, size = 0x4, offset = 0x4, fixed_abs, tag = 'smem constant byte address 0x4 - core index']
  #allocation1 [shape = 'u32[72,128]{1,0:T(1,128)}', space=vmem, size = 0x9000, scoped, tag = 'internal scratch']
  #allocation2 [shape = 'f32[8,512]{1,0:T(8,128)}', space=vmem, size = 0x4000, scoped, tag = 'scratch operand']
  %s0 = inlined_call_operand.vmem [shape: f32[8,16], index: 0, kind: input, shape index: {}]
  %s1 = inlined_call_operand.vmem [shape: f32[8,128], index: 1, kind: input, shape index: {}]
  %s2 = inlined_call_operand.vmem [shape: f32[8,128], index: 2, kind: input, shape index: {}]
  %s3 = inlined_call_operand.vmem [shape: f32[16,128], index: 3, kind: input, shape index: {}]
  %s4 = inlined_call_operand.vmem [shape: f32[1,128], index: 4, kind: input, shape index: {}]
  %s5 = inlined_call_operand.vmem [shape: f32[128,512], index: 5, kind: input, shape index: {}]
  %s6 = inlined_call_operand.vmem [shape: f32[128,128], index: 6, kind: input, shape index: {}]
  %s7 = inlined_call_operand.vmem [shape: f32[1,128], index: 7, kind: input, shape index: {}]
  %s8 = inlined_call_operand.vmem [shape: f32[128,512], index: 8, kind: input, shape index: {}]
  %s9 = inlined_call_operand.vmem [shape: f32[1,512], index: 9, kind: input, shape index: {}]
  %s10 = inlined_call_operand.vmem [shape: f32[8,128], index: 10, kind: output, shape index: {0}]
  %s11 = inlined_call_operand.vmem [shape: f32[8,128], index: 11, kind: output, shape index: {1}]
  %12 = xla_tuple %s10, %s11
  %s13 = sld [smem:[#allocation0]]
  $region58: #{lstm_cell_sequence.1} parent=0
    _
  %s15 = ssub.s32 1, %s13
  %s16 = scalar_select 0, %s15, %s13
  // Predicated region
  $region2: #{lstm_cell_sequence.1} parent=0 // pred_check
    _
  $region3: #{lstm_cell_sequence.1} parent=0 // pred_check_branch
    %18 = sbr.rel (0) target = $region5
  $region4: #{lstm_cell_sequence.1} parent=0 // pred_region
    _
  $region5: #{lstm_cell_sequence.1} parent=0 // pred_fallthru
    _
  // Predicated region
  $region6: #{lstm_cell_sequence.1} parent=0 // pred_check
    _
  $region7: #{lstm_cell_sequence.1} parent=0 // pred_check_branch
    %20 = sbr.rel (0) target = $region9
  $region8: #{lstm_cell_sequence.1} parent=0 // pred_region
    _
  $region9: #{lstm_cell_sequence.1} parent=0 // pred_fallthru
    _
  // Predicated region
  $region10: #{lstm_cell_sequence.1} parent=0 // pred_check
    _
  $region11: #{lstm_cell_sequence.1} parent=0 // pred_check_branch
    %22 = sbr.rel (0) target = $region13
  $region12: #{lstm_cell_sequence.1} parent=0 // pred_region
    _
  $region13: #{lstm_cell_sequence.1} parent=0 // pred_fallthru
    _
  // Predicated region
  $region14: #{lstm_cell_sequence.1} parent=0 // pred_check
    _
  $region15: #{lstm_cell_sequence.1} parent=0 // pred_check_branch
    %24 = sbr.rel (0) target = $region17
  $region16: #{lstm_cell_sequence.1} parent=0 // pred_region
    _
  $region17: #{lstm_cell_sequence.1} parent=0 // pred_fallthru
    _
  // Predicated region
  $region18: #{lstm_cell_sequence.1} parent=0 // pred_check
    _
  $region19: #{lstm_cell_sequence.1} parent=0 // pred_check_branch
    %26 = sbr.rel (0) target = $region21
  $region20: #{lstm_cell_sequence.1} parent=0 // pred_region
    _
  $region21: #{lstm_cell_sequence.1} parent=0 // pred_fallthru
    _
  // Predicated region
  $region22: #{lstm_cell_sequence.1} parent=0 // pred_check
    _
  $region23: #{lstm_cell_sequence.1} parent=0 // pred_check_branch
    %28 = sbr.rel (0) target = $region25
  $region24: #{lstm_cell_sequence.1} parent=0 // pred_region
    _
  $region25: #{lstm_cell_sequence.1} parent=0 // pred_fallthru
    _
  // Predicated region
  $region26: #{lstm_cell_sequence.1} parent=0 // pred_check
    _
  $region27: #{lstm_cell_sequence.1} parent=0 // pred_check_branch
    %30 = sbr.rel (0) target = $region29
  $region28: #{lstm_cell_sequence.1} parent=0 // pred_region
    _
  $region29: #{lstm_cell_sequence.1} parent=0 // pred_fallthru
    _
  // Predicated region
  $region30: #{lstm_cell_sequence.1} parent=0 // pred_check
    _
  $region31: #{lstm_cell_sequence.1} parent=0 // pred_check_branch
    %32 = sbr.rel (0) target = $region33
  $region32: #{lstm_cell_sequence.1} parent=0 // pred_region
    _
  $region33: #{lstm_cell_sequence.1} parent=0 // pred_fallthru
    _
  // Predicated region
  $region34: #{lstm_cell_sequence.1} parent=0 // pred_check
    _
  $region35: #{lstm_cell_sequence.1} parent=0 // pred_check_branch
    %34 = sbr.rel (0) target = $region37
  $region36: #{lstm_cell_sequence.1} parent=0 // pred_region
    _
  $region37: #{lstm_cell_sequence.1} parent=0 // pred_fallthru
    _
  // Predicated region
  $region38: #{lstm_cell_sequence.1} parent=0 // pred_check
    _
  $region39: #{lstm_cell_sequence.1} parent=0 // pred_check_branch
    %36 = sbr.rel (0) target = $region41
  $region40: #{lstm_cell_sequence.1} parent=0 // pred_region
    _
  $region41: #{lstm_cell_sequence.1} parent=0 // pred_fallthru
    _
  %v37 = vld [vmem:[%s0] sm:$0xff]
  %v38 = vld [vmem:[%s3] sm:$0xff]
  %v39 = vld [vmem:[%s3 + $0x8] sm:$0xff]
  %v40 = vld [vmem:[%s4] sm:$0x1]
  %v42 = vperm.slane %v40, 0
  %vm44 = vcmask 130048
  %v46 = vsel %vm44, %v37, 0
  %48 = vmatpush.msra.mxu0 0.0
  %49 = vmatpush.msra.mxu0 0.0
  %50 = vmatpush.msra.mxu0 0.0
  %51 = vmatpush.msra.mxu0 0.0
  %52 = vmatpush.msra.mxu0 0.0
  %53 = vmatpush.msra.mxu0 0.0
  %54 = vmatpush.msra.mxu0 0.0
  %55 = vmatpush.msra.mxu0 0.0
  %56 = vmatpush.msra.mxu0 0.0
  %57 = vmatpush.msra.mxu0 0.0
  %58 = vmatpush.msra.mxu0 0.0
  %59 = vmatpush.msra.mxu0 0.0
  %60 = vmatpush.msra.mxu0 0.0
  %61 = vmatpush.msra.mxu0 0.0
  %62 = vmatpush.msra.mxu0 %v39
  %63 = vmatpush.msra.mxu0 %v38
  %64 = vmatmul.f32.gmra.mxu0 %v46
  %v65 = vpop.f32.mrf.mxu0
  %v66 = vadd.f32 %v42, %v65
  %67 = vdwg.mxu0
  %v68 = vmax.f32 %v66, 0.0
  %v69 = vld [vmem:[%s5] sm:$0xff]
  %v70 = vld [vmem:[%s5 + $0x8] sm:$0xff]
  %v71 = vld [vmem:[%s5 + $0x10] sm:$0xff]
  %v72 = vld [vmem:[%s5 + $0x18] sm:$0xff]
  %v73 = vld [vmem:[%s5 + $0x20] sm:$0xff]
  %v74 = vld [vmem:[%s5 + $0x28] sm:$0xff]
  %v75 = vld [vmem:[%s5 + $0x30] sm:$0xff]
  %v76 = vld [vmem:[%s5 + $0x38] sm:$0xff]
  %v77 = vld [vmem:[%s5 + $0x40] sm:$0xff]
  %v78 = vld [vmem:[%s5 + $0x48] sm:$0xff]
  %v79 = vld [vmem:[%s5 + $0x50] sm:$0xff]
  %v80 = vld [vmem:[%s5 + $0x58] sm:$0xff]
  %v81 = vld [vmem:[%s5 + $0x60] sm:$0xff]
  %v82 = vld [vmem:[%s5 + $0x68] sm:$0xff]
  %v83 = vld [vmem:[%s5 + $0x70] sm:$0xff]
  %v84 = vld [vmem:[%s5 + $0x78] sm:$0xff]
  %v85 = vld [vmem:[%s5 + $0x80] sm:$0xff]
  %v86 = vld [vmem:[%s5 + $0x88] sm:$0xff]
  %v87 = vld [vmem:[%s5 + $0x90] sm:$0xff]
  %v88 = vld [vmem:[%s5 + $0x98] sm:$0xff]
  %v89 = vld [vmem:[%s5 + $0xa0] sm:$0xff]
  %v90 = vld [vmem:[%s5 + $0xa8] sm:$0xff]
  %v91 = vld [vmem:[%s5 + $0xb0] sm:$0xff]
  %v92 = vld [vmem:[%s5 + $0xb8] sm:$0xff]
  %v93 = vld [vmem:[%s5 + $0xc0] sm:$0xff]
  %v94 = vld [vmem:[%s5 + $0xc8] sm:$0xff]
  %v95 = vld [vmem:[%s5 + $0xd0] sm:$0xff]
  %v96 = vld [vmem:[%s5 + $0xd8] sm:$0xff]
  %v97 = vld [vmem:[%s5 + $0xe0] sm:$0xff]
  %v98 = vld [vmem:[%s5 + $0xe8] sm:$0xff]
  %v99 = vld [vmem:[%s5 + $0xf0] sm:$0xff]
  %v100 = vld [vmem:[%s5 + $0xf8] sm:$0xff]
  %v101 = vld [vmem:[%s5 + $0x100] sm:$0xff]
  %v102 = vld [vmem:[%s5 + $0x108] sm:$0xff]
  %v103 = vld [vmem:[%s5 + $0x110] sm:$0xff]
  %v104 = vld [vmem:[%s5 + $0x118] sm:$0xff]
  %v105 = vld [vmem:[%s5 + $0x120] sm:$0xff]
  %v106 = vld [vmem:[%s5 + $0x128] sm:$0xff]
  %v107 = vld [vmem:[%s5 + $0x130] sm:$0xff]
  %v108 = vld [vmem:[%s5 + $0x138] sm:$0xff]
  %v109 = vld [vmem:[%s5 + $0x140] sm:$0xff]
  %v110 = vld [vmem:[%s5 + $0x148] sm:$0xff]
  %v111 = vld [vmem:[%s5 + $0x150] sm:$0xff]
  %v112 = vld [vmem:[%s5 + $0x158] sm:$0xff]
  %v113 = vld [vmem:[%s5 + $0x160] sm:$0xff]
  %v114 = vld [vmem:[%s5 + $0x168] sm:$0xff]
  %v115 = vld [vmem:[%s5 + $0x170] sm:$0xff]
  %v116 = vld [vmem:[%s5 + $0x178] sm:$0xff]
  %v117 = vld [vmem:[%s5 + $0x180] sm:$0xff]
  %v118 = vld [vmem:[%s5 + $0x188] sm:$0xff]
  %v119 = vld [vmem:[%s5 + $0x190] sm:$0xff]
  %v120 = vld [vmem:[%s5 + $0x198] sm:$0xff]
  %v121 = vld [vmem:[%s5 + $0x1a0] sm:$0xff]
  %v122 = vld [vmem:[%s5 + $0x1a8] sm:$0xff]
  %v123 = vld [vmem:[%s5 + $0x1b0] sm:$0xff]
  %v124 = vld [vmem:[%s5 + $0x1b8] sm:$0xff]
  %v125 = vld [vmem:[%s5 + $0x1c0] sm:$0xff]
  %v126 = vld [vmem:[%s5 + $0x1c8] sm:$0xff]
  %v127 = vld [vmem:[%s5 + $0x1d0] sm:$0xff]
  %v128 = vld [vmem:[%s5 + $0x1d8] sm:$0xff]
  %v129 = vld [vmem:[%s5 + $0x1e0] sm:$0xff]
  %v130 = vld [vmem:[%s5 + $0x1e8] sm:$0xff]
  %v131 = vld [vmem:[%s5 + $0x1f0] sm:$0xff]
  %v132 = vld [vmem:[%s5 + $0x1f8] sm:$0xff]
  %v133 = vld [vmem:[%s9] sm:$0xf]
  %v135 = vperm.slane %v133, 0
  %v136 = vperm.slane %v133, 1
  %v137 = vperm.slane %v133, 2
  %v138 = vperm.slane %v133, 3
  %143 = vmatpush.msra.mxu0 %v129
  %144 = vmatpush.msra.mxu0 %v125
  %145 = vmatpush.msra.mxu0 %v121
  %146 = vmatpush.msra.mxu0 %v117
  %147 = vmatpush.msra.mxu0 %v113
  %148 = vmatpush.msra.mxu0 %v109
  %149 = vmatpush.msra.mxu0 %v105
  %150 = vmatpush.msra.mxu0 %v101
  %151 = vmatpush.msra.mxu0 %v97
  %152 = vmatpush.msra.mxu0 %v93
  %153 = vmatpush.msra.mxu0 %v89
  %154 = vmatpush.msra.mxu0 %v85
  %155 = vmatpush.msra.mxu0 %v81
  %156 = vmatpush.msra.mxu0 %v77
  %157 = vmatpush.msra.mxu0 %v73
  %158 = vmatpush.msra.mxu0 %v69
  %159 = vmatmul.f32.gmra.mxu0 %v68
  %v160 = vpop.f32.mrf.mxu0
  %v161 = vadd.f32 %v135, %v160
  %162 = vdwg.mxu0
  %163 = vmatpush.msra.mxu0 %v130
  %164 = vmatpush.msra.mxu0 %v126
  %165 = vmatpush.msra.mxu0 %v122
  %166 = vmatpush.msra.mxu0 %v118
  %167 = vmatpush.msra.mxu0 %v114
  %168 = vmatpush.msra.mxu0 %v110
  %169 = vmatpush.msra.mxu0 %v106
  %170 = vmatpush.msra.mxu0 %v102
  %171 = vmatpush.msra.mxu0 %v98
  %172 = vmatpush.msra.mxu0 %v94
  %173 = vmatpush.msra.mxu0 %v90
  %174 = vmatpush.msra.mxu0 %v86
  %175 = vmatpush.msra.mxu0 %v82
  %176 = vmatpush.msra.mxu0 %v78
  %177 = vmatpush.msra.mxu0 %v74
  %178 = vmatpush.msra.mxu0 %v70
  %179 = vmatmul.f32.gmra.mxu0 %v68
  %v180 = vpop.f32.mrf.mxu0
  %v181 = vadd.f32 %v136, %v180
  %182 = vdwg.mxu0
  %183 = vmatpush.msra.mxu0 %v131
  %184 = vmatpush.msra.mxu0 %v127
  %185 = vmatpush.msra.mxu0 %v123
  %186 = vmatpush.msra.mxu0 %v119
  %187 = vmatpush.msra.mxu0 %v115
  %188 = vmatpush.msra.mxu0 %v111
  %189 = vmatpush.msra.mxu0 %v107
  %190 = vmatpush.msra.mxu0 %v103
  %191 = vmatpush.msra.mxu0 %v99
  %192 = vmatpush.msra.mxu0 %v95
  %193 = vmatpush.msra.mxu0 %v91
  %194 = vmatpush.msra.mxu0 %v87
  %195 = vmatpush.msra.mxu0 %v83
  %196 = vmatpush.msra.mxu0 %v79
  %197 = vmatpush.msra.mxu0 %v75
  %198 = vmatpush.msra.mxu0 %v71
  %199 = vmatmul.f32.gmra.mxu0 %v68
  %v200 = vpop.f32.mrf.mxu0
  %v201 = vadd.f32 %v137, %v200
  %202 = vdwg.mxu0
  %203 = vmatpush.msra.mxu0 %v132
  %204 = vmatpush.msra.mxu0 %v128
  %205 = vmatpush.msra.mxu0 %v124
  %206 = vmatpush.msra.mxu0 %v120
  %207 = vmatpush.msra.mxu0 %v116
  %208 = vmatpush.msra.mxu0 %v112
  %209 = vmatpush.msra.mxu0 %v108
  %210 = vmatpush.msra.mxu0 %v104
  %211 = vmatpush.msra.mxu0 %v100
  %212 = vmatpush.msra.mxu0 %v96
  %213 = vmatpush.msra.mxu0 %v92
  %214 = vmatpush.msra.mxu0 %v88
  %215 = vmatpush.msra.mxu0 %v84
  %216 = vmatpush.msra.mxu0 %v80
  %217 = vmatpush.msra.mxu0 %v76
  %218 = vmatpush.msra.mxu0 %v72
  %219 = vmatmul.f32.gmra.mxu0 %v68
  %v220 = vpop.f32.mrf.mxu0
  %v221 = vadd.f32 %v138, %v220
  %222 = vdwg.mxu0
  %223 = vst [vmem:[#allocation2] sm:$0xff] %v161
  %224 = vst [vmem:[#allocation2 + $0x8] sm:$0xff] %v181
  %225 = vst [vmem:[#allocation2 + $0x10] sm:$0xff] %v201
  %226 = vst [vmem:[#allocation2 + $0x18] sm:$0xff] %v221
  %v227 = vld [vmem:[%s6] sm:$0xff]
  %v228 = vld [vmem:[%s6 + $0x8] sm:$0xff]
  %v229 = vld [vmem:[%s6 + $0x10] sm:$0xff]
  %v230 = vld [vmem:[%s6 + $0x18] sm:$0xff]
  %v231 = vld [vmem:[%s6 + $0x20] sm:$0xff]
  %v232 = vld [vmem:[%s6 + $0x28] sm:$0xff]
  %v233 = vld [vmem:[%s6 + $0x30] sm:$0xff]
  %v234 = vld [vmem:[%s6 + $0x38] sm:$0xff]
  %v235 = vld [vmem:[%s6 + $0x40] sm:$0xff]
  %v236 = vld [vmem:[%s6 + $0x48] sm:$0xff]
  %v237 = vld [vmem:[%s6 + $0x50] sm:$0xff]
  %v238 = vld [vmem:[%s6 + $0x58] sm:$0xff]
  %v239 = vld [vmem:[%s6 + $0x60] sm:$0xff]
  %v240 = vld [vmem:[%s6 + $0x68] sm:$0xff]
  %v241 = vld [vmem:[%s6 + $0x70] sm:$0xff]
  %v242 = vld [vmem:[%s6 + $0x78] sm:$0xff]
  %v243 = vld [vmem:[%s7] sm:$0x1]
  %v244 = vld [vmem:[%s8] sm:$0xff]
  %v245 = vld [vmem:[%s8 + $0x8] sm:$0xff]
  %v246 = vld [vmem:[%s8 + $0x10] sm:$0xff]
  %v247 = vld [vmem:[%s8 + $0x18] sm:$0xff]
  %v248 = vld [vmem:[%s8 + $0x20] sm:$0xff]
  %v249 = vld [vmem:[%s8 + $0x28] sm:$0xff]
  %v250 = vld [vmem:[%s8 + $0x30] sm:$0xff]
  %v251 = vld [vmem:[%s8 + $0x38] sm:$0xff]
  %v252 = vld [vmem:[%s8 + $0x40] sm:$0xff]
  %v253 = vld [vmem:[%s8 + $0x48] sm:$0xff]
  %v254 = vld [vmem:[%s8 + $0x50] sm:$0xff]
  %v255 = vld [vmem:[%s8 + $0x58] sm:$0xff]
  %v256 = vld [vmem:[%s8 + $0x60] sm:$0xff]
  %v257 = vld [vmem:[%s8 + $0x68] sm:$0xff]
  %v258 = vld [vmem:[%s8 + $0x70] sm:$0xff]
  %v259 = vld [vmem:[%s8 + $0x78] sm:$0xff]
  %v260 = vld [vmem:[%s8 + $0x80] sm:$0xff]
  %v261 = vld [vmem:[%s8 + $0x88] sm:$0xff]
  %v262 = vld [vmem:[%s8 + $0x90] sm:$0xff]
  %v263 = vld [vmem:[%s8 + $0x98] sm:$0xff]
  %v264 = vld [vmem:[%s8 + $0xa0] sm:$0xff]
  %v265 = vld [vmem:[%s8 + $0xa8] sm:$0xff]
  %v266 = vld [vmem:[%s8 + $0xb0] sm:$0xff]
  %v267 = vld [vmem:[%s8 + $0xb8] sm:$0xff]
  %v268 = vld [vmem:[%s8 + $0xc0] sm:$0xff]
  %v269 = vld [vmem:[%s8 + $0xc8] sm:$0xff]
  %v270 = vld [vmem:[%s8 + $0xd0] sm:$0xff]
  %v271 = vld [vmem:[%s8 + $0xd8] sm:$0xff]
  %v272 = vld [vmem:[%s8 + $0xe0] sm:$0xff]
  %v273 = vld [vmem:[%s8 + $0xe8] sm:$0xff]
  %v274 = vld [vmem:[%s8 + $0xf0] sm:$0xff]
  %v275 = vld [vmem:[%s8 + $0xf8] sm:$0xff]
  %v276 = vld [vmem:[%s8 + $0x100] sm:$0xff]
  %v277 = vld [vmem:[%s8 + $0x108] sm:$0xff]
  %v278 = vld [vmem:[%s8 + $0x110] sm:$0xff]
  %v279 = vld [vmem:[%s8 + $0x118] sm:$0xff]
  %v280 = vld [vmem:[%s8 + $0x120] sm:$0xff]
  %v281 = vld [vmem:[%s8 + $0x128] sm:$0xff]
  %v282 = vld [vmem:[%s8 + $0x130] sm:$0xff]
  %v283 = vld [vmem:[%s8 + $0x138] sm:$0xff]
  %v284 = vld [vmem:[%s8 + $0x140] sm:$0xff]
  %v285 = vld [vmem:[%s8 + $0x148] sm:$0xff]
  %v286 = vld [vmem:[%s8 + $0x150] sm:$0xff]
  %v287 = vld [vmem:[%s8 + $0x158] sm:$0xff]
  %v288 = vld [vmem:[%s8 + $0x160] sm:$0xff]
  %v289 = vld [vmem:[%s8 + $0x168] sm:$0xff]
  %v290 = vld [vmem:[%s8 + $0x170] sm:$0xff]
  %v291 = vld [vmem:[%s8 + $0x178] sm:$0xff]
  %v292 = vld [vmem:[%s8 + $0x180] sm:$0xff]
  %v293 = vld [vmem:[%s8 + $0x188] sm:$0xff]
  %v294 = vld [vmem:[%s8 + $0x190] sm:$0xff]
  %v295 = vld [vmem:[%s8 + $0x198] sm:$0xff]
  %v296 = vld [vmem:[%s8 + $0x1a0] sm:$0xff]
  %v297 = vld [vmem:[%s8 + $0x1a8] sm:$0xff]
  %v298 = vld [vmem:[%s8 + $0x1b0] sm:$0xff]
  %v299 = vld [vmem:[%s8 + $0x1b8] sm:$0xff]
  %v300 = vld [vmem:[%s8 + $0x1c0] sm:$0xff]
  %v301 = vld [vmem:[%s8 + $0x1c8] sm:$0xff]
  %v302 = vld [vmem:[%s8 + $0x1d0] sm:$0xff]
  %v303 = vld [vmem:[%s8 + $0x1d8] sm:$0xff]
  %v304 = vld [vmem:[%s8 + $0x1e0] sm:$0xff]
  %v305 = vld [vmem:[%s8 + $0x1e8] sm:$0xff]
  %v306 = vld [vmem:[%s8 + $0x1f0] sm:$0xff]
  %v307 = vld [vmem:[%s8 + $0x1f8] sm:$0xff]
  %v308 = vld [vmem:[%s1] sm:$0xff]
  %v309 = vld [vmem:[%s2] sm:$0xff]
  %v311 = vperm.slane %v243, 0
  %313 = vmatpush.msra.mxu0 %v242
  %314 = vmatpush.msra.mxu0 %v241
  %315 = vmatpush.msra.mxu0 %v240
  %316 = vmatpush.msra.mxu0 %v239
  %317 = vmatpush.msra.mxu0 %v238
  %318 = vmatpush.msra.mxu0 %v237
  %319 = vmatpush.msra.mxu0 %v236
  %320 = vmatpush.msra.mxu0 %v235
  %321 = vmatpush.msra.mxu0 %v234
  %322 = vmatpush.msra.mxu0 %v233
  %323 = vmatpush.msra.mxu0 %v232
  %324 = vmatpush.msra.mxu0 %v231
  %325 = vmatpush.msra.mxu0 %v230
  %326 = vmatpush.msra.mxu0 %v229
  %327 = vmatpush.msra.mxu0 %v228
  %328 = vmatpush.msra.mxu0 %v227
  %329 = vmatmul.f32.gmra.mxu0 %v308
  %v330 = vpop.f32.mrf.mxu0
  %v331 = vadd.f32 %v311, %v330
  %332 = vdwg.mxu0
  %v333 = vmax.f32 %v331, 0.0
  %334 = vmatpush.msra.mxu0 %v304
  %335 = vmatpush.msra.mxu0 %v300
  %336 = vmatpush.msra.mxu0 %v296
  %337 = vmatpush.msra.mxu0 %v292
  %338 = vmatpush.msra.mxu0 %v288
  %339 = vmatpush.msra.mxu0 %v284
  %340 = vmatpush.msra.mxu0 %v280
  %341 = vmatpush.msra.mxu0 %v276
  %342 = vmatpush.msra.mxu0 %v272
  %343 = vmatpush.msra.mxu0 %v268
  %344 = vmatpush.msra.mxu0 %v264
  %345 = vmatpush.msra.mxu0 %v260
  %346 = vmatpush.msra.mxu0 %v256
  %347 = vmatpush.msra.mxu0 %v252
  %348 = vmatpush.msra.mxu0 %v248
  %349 = vmatpush.msra.mxu0 %v244
  %350 = vmatmul.f32.gmra.mxu0 %v333
  %v351 = vpop.f32.mrf.mxu0
  %v352 = vadd.f32 0.0, %v351
  %353 = vdwg.mxu0
  %354 = vmatpush.msra.mxu0 %v305
  %355 = vmatpush.msra.mxu0 %v301
  %356 = vmatpush.msra.mxu0 %v297
  %357 = vmatpush.msra.mxu0 %v293
  %358 = vmatpush.msra.mxu0 %v289
  %359 = vmatpush.msra.mxu0 %v285
  %360 = vmatpush.msra.mxu0 %v281
  %361 = vmatpush.msra.mxu0 %v277
  %362 = vmatpush.msra.mxu0 %v273
  %363 = vmatpush.msra.mxu0 %v269
  %364 = vmatpush.msra.mxu0 %v265
  %365 = vmatpush.msra.mxu0 %v261
  %366 = vmatpush.msra.mxu0 %v257
  %367 = vmatpush.msra.mxu0 %v253
  %368 = vmatpush.msra.mxu0 %v249
  %369 = vmatpush.msra.mxu0 %v245
  %370 = vmatmul.f32.gmra.mxu0 %v333
  %v371 = vpop.f32.mrf.mxu0
  %v372 = vadd.f32 0.0, %v371
  %373 = vdwg.mxu0
  %374 = vmatpush.msra.mxu0 %v306
  %375 = vmatpush.msra.mxu0 %v302
  %376 = vmatpush.msra.mxu0 %v298
  %377 = vmatpush.msra.mxu0 %v294
  %378 = vmatpush.msra.mxu0 %v290
  %379 = vmatpush.msra.mxu0 %v286
  %380 = vmatpush.msra.mxu0 %v282
  %381 = vmatpush.msra.mxu0 %v278
  %382 = vmatpush.msra.mxu0 %v274
  %383 = vmatpush.msra.mxu0 %v270
  %384 = vmatpush.msra.mxu0 %v266
  %385 = vmatpush.msra.mxu0 %v262
  %386 = vmatpush.msra.mxu0 %v258
  %387 = vmatpush.msra.mxu0 %v254
  %388 = vmatpush.msra.mxu0 %v250
  %389 = vmatpush.msra.mxu0 %v246
  %390 = vmatmul.f32.gmra.mxu0 %v333
  %v391 = vpop.f32.mrf.mxu0
  %v392 = vadd.f32 0.0, %v391
  %393 = vdwg.mxu0
  %394 = vmatpush.msra.mxu0 %v307
  %395 = vmatpush.msra.mxu0 %v303
  %396 = vmatpush.msra.mxu0 %v299
  %397 = vmatpush.msra.mxu0 %v295
  %398 = vmatpush.msra.mxu0 %v291
  %399 = vmatpush.msra.mxu0 %v287
  %400 = vmatpush.msra.mxu0 %v283
  %401 = vmatpush.msra.mxu0 %v279
  %402 = vmatpush.msra.mxu0 %v275
  %403 = vmatpush.msra.mxu0 %v271
  %404 = vmatpush.msra.mxu0 %v267
  %405 = vmatpush.msra.mxu0 %v263
  %406 = vmatpush.msra.mxu0 %v259
  %407 = vmatpush.msra.mxu0 %v255
  %408 = vmatpush.msra.mxu0 %v251
  %409 = vmatpush.msra.mxu0 %v247
  %410 = vmatmul.f32.gmra.mxu0 %v333
  %v411 = vpop.f32.mrf.mxu0
  %v412 = vadd.f32 0.0, %v411
  %413 = vdwg.mxu0
  %s414 = smul.u32 0, 4
  %s415 = smul.addr %s414, 8
  %s416 = scalar_lea.vmem [#allocation2], %s415
  %v417 = vld [vmem:[%s416] sm:$0xff]
  %v418 = vld [vmem:[%s416 + $0x8] sm:$0xff]
  %v419 = vld [vmem:[%s416 + $0x10] sm:$0xff]
  %v420 = vld [vmem:[%s416 + $0x18] sm:$0xff]
  %v421 = vadd.f32 %v417, %v352
  %v422 = vadd.f32 %v418, %v372
  %v423 = vadd.f32 %v419, %v392
  %v424 = vadd.f32 %v420, %v412
  %v425 = vxor.u32 %v421, 2147483648
  %v426 = vmul.f32 %v425, 1.442695
  %v427 = vpow.pop %v426
  %v428 = vadd.f32 %v427, 1.0
  %v429 = vrcp.pop %v428
  %v430 = vmul.f32 %v428, %v429
  %v431 = vsub.f32 1.0, %v430
  %v432 = vmul.f32 %v429, %v431
  %v433 = vadd.f32 %v429, %v432
  %vm434 = vweird.f32 %v428
  %vm435 = vweird.f32 %v429
  %vm436 = vmor %vm434, %vm435
  %v437 = vsel %vm436, %v429, %v433
  %v438 = vand.u32 2147483647, %v428
  %vm439 = vcmp.eq.f32.partialorder %v438, 8.507059e+37
  %v440 = vand.u32 %v428, 2147483648
  %v441 = vor.u32 1.1754944e-38, %v440
  %v442 = vsel %vm439, %v441, %v437
  %v443 = vmul.f32 1.0, %v442
  %v444 = vxor.u32 %v422, 2147483648
  %v445 = vmul.f32 %v444, 1.442695
  %v446 = vpow.pop %v445
  %v447 = vadd.f32 %v446, 1.0
  %v448 = vrcp.pop %v447
  %v449 = vmul.f32 %v447, %v448
  %v450 = vsub.f32 1.0, %v449
  %v451 = vmul.f32 %v448, %v450
  %v452 = vadd.f32 %v448, %v451
  %vm453 = vweird.f32 %v447
  %vm454 = vweird.f32 %v448
  %vm455 = vmor %vm453, %vm454
  %v456 = vsel %vm455, %v448, %v452
  %v457 = vand.u32 2147483647, %v447
  %vm458 = vcmp.eq.f32.partialorder %v457, 8.507059e+37
  %v459 = vand.u32 %v447, 2147483648
  %v460 = vor.u32 1.1754944e-38, %v459
  %v461 = vsel %vm458, %v460, %v456
  %v462 = vmul.f32 1.0, %v461
  %v463 = vtanh.pop %v423
  %v464 = vxor.u32 %v424, 2147483648
  %v465 = vmul.f32 %v464, 1.442695
  %v466 = vpow.pop %v465
  %v467 = vadd.f32 %v466, 1.0
  %v468 = vrcp.pop %v467
  %v469 = vmul.f32 %v467, %v468
  %v470 = vsub.f32 1.0, %v469
  %v471 = vmul.f32 %v468, %v470
  %v472 = vadd.f32 %v468, %v471
  %vm473 = vweird.f32 %v467
  %vm474 = vweird.f32 %v468
  %vm475 = vmor %vm473, %vm474
  %v476 = vsel %vm475, %v468, %v472
  %v477 = vand.u32 2147483647, %v467
  %vm478 = vcmp.eq.f32.partialorder %v477, 8.507059e+37
  %v479 = vand.u32 %v467, 2147483648
  %v480 = vor.u32 1.1754944e-38, %v479
  %v481 = vsel %vm478, %v480, %v476
  %v482 = vmul.f32 1.0, %v481
  %v483 = vmul.f32 %v462, %v309
  %v484 = vmul.f32 %v443, %v463
  %v485 = vadd.f32 %v483, %v484
  %v486 = vtanh.pop %v485
  %v487 = vmul.f32 %v482, %v486
  %488 = vst [vmem:[%s10] sm:$0xff] %v487
  %489 = vst [vmem:[%s11] sm:$0xff] %v485
  // Predicated region
  $region42: #{lstm_cell_sequence.1} parent=0 // pred_check
    _
  $region43: #{lstm_cell_sequence.1} parent=0 // pred_check_branch
    %491 = sbr.rel (0) target = $region45
  $region44: #{lstm_cell_sequence.1} parent=0 // pred_region
    _
  $region45: #{lstm_cell_sequence.1} parent=0 // pred_fallthru
    _
  // Predicated region
  $region46: #{lstm_cell_sequence.1} parent=0 // pred_check
    _
  $region47: #{lstm_cell_sequence.1} parent=0 // pred_check_branch
    %493 = sbr.rel (0) target = $region49
  $region48: #{lstm_cell_sequence.1} parent=0 // pred_region
    _
  $region49: #{lstm_cell_sequence.1} parent=0 // pred_fallthru
    _
  // Predicated region
  $region50: #{lstm_cell_sequence.1} parent=0 // pred_check
    _
  $region51: #{lstm_cell_sequence.1} parent=0 // pred_check_branch
    %495 = sbr.rel (0) target = $region53
  $region52: #{lstm_cell_sequence.1} parent=0 // pred_region
    _
  $region53: #{lstm_cell_sequence.1} parent=0 // pred_fallthru
    _
  // Predicated region
  $region54: #{lstm_cell_sequence.1} parent=0 // pred_check
    _
  $region55: #{lstm_cell_sequence.1} parent=0 // pred_check_branch
    %497 = sbr.rel (0) target = $region57
  $region56: #{lstm_cell_sequence.1} parent=0 // pred_region
    _
  $region57: #{lstm_cell_sequence.1} parent=0 // pred_fallthru
    _

</llo_original>
